<compile_context>
chip_gen: v7x
topology: tpu7x:2x2x1
jax: 0.10.0
libtpu: 0.0.40
codegen_flags: <defaults>
</compile_context>

<pallas_src>
import jax
import jax.numpy as jnp
from jax.experimental import pallas as pl
from jax.experimental.pallas import tpu as pltpu


# -----------------------------------------------------------------------------
# helpers
# -----------------------------------------------------------------------------

def _pick_tile(n, target, quantum):
    """Largest divisor of n that is <= target and a multiple of quantum, else n."""
    if n <= target or n % quantum != 0:
        return n
    t = (target // quantum) * quantum
    while t >= quantum:
        if n % t == 0:
            return t
        t -= quantum
    return n


def _vmem_limit(nbytes):
    # floor at 32 MiB (>= default scoped on v6e/v7x), cap at 48 MiB (< v7x's
    # 64 MiB physical, comfortably inside v5e/v6e's 128 MiB).
    return int(min(max(2 * nbytes, 32 << 20), 48 << 20))


# -----------------------------------------------------------------------------
# Kernel 1: XW = X @ W  (row-tiled feature projection, bf16 out)
# -----------------------------------------------------------------------------

def xw_kernel(x_ref, w_ref, o_ref):
    o_ref[...] = jnp.dot(x_ref[...], w_ref[...],
                         preferred_element_type=jnp.float32).astype(o_ref.dtype)


def _xw(x_bf, w_bf, row_tile_target=1024):
    n, f = x_bf.shape
    h = w_bf.shape[1]
    tn = _pick_tile(n, row_tile_target, 8)
    return pl.pallas_call(
        xw_kernel,
        out_shape=jax.ShapeDtypeStruct((n, h), jnp.bfloat16),
        grid=(n // tn,),
        in_specs=[pl.BlockSpec((tn, f), lambda i: (i, 0)),
                  pl.BlockSpec((f, h), lambda i: (0, 0))],
        out_specs=pl.BlockSpec((tn, h), lambda i: (i, 0)),
        compiler_params=pltpu.CompilerParams(
            dimension_semantics=("parallel",),
            vmem_limit_bytes=_vmem_limit(2 * (tn * f * 2 + f * h * 2 + tn * h * 2))),
    )(x_bf, w_bf)


# -----------------------------------------------------------------------------
# Kernel 2: H = relu(A_norm @ XW + b)   (tiled over A rows and reduction dim)
# -----------------------------------------------------------------------------

def axw_bias_relu_kernel(a_ref, xw_ref, b_ref, o_ref, acc_ref):
    k = pl.program_id(1)

    @pl.when(k == 0)
    def _():
        acc_ref[...] = jnp.zeros_like(acc_ref)

    acc_ref[...] += jnp.dot(a_ref[...], xw_ref[...],
                            preferred_element_type=jnp.float32)

    @pl.when(k == pl.num_programs(1) - 1)
    def _():
        o_ref[...] = jnp.maximum(acc_ref[...] + b_ref[...], 0.0).astype(o_ref.dtype)


def _a_matmul_bias_relu(a_bf, xw_bf, bias_f32, tm, tk):
    n = a_bf.shape[0]
    h = xw_bf.shape[1]
    # VMEM budget: double-buffered A tile + XW tile + out tile, plus f32 acc.
    nbytes = 2 * (tm * tk * 2 + tk * h * 2 + tm * h * 2) + tm * h * 4 + h * 4
    flops = 2 * n * n * h
    bytes_accessed = n * n * 2 + n * h * 2 * 2 + h * 4
    return pl.pallas_call(
        axw_bias_relu_kernel,
        out_shape=jax.ShapeDtypeStruct((n, h), jnp.bfloat16),
        grid=(n // tm, n // tk),
        in_specs=[pl.BlockSpec((tm, tk), lambda i, k: (i, k)),
                  pl.BlockSpec((tk, h), lambda i, k: (k, 0)),
                  pl.BlockSpec((1, h), lambda i, k: (0, 0))],
        out_specs=pl.BlockSpec((tm, h), lambda i, k: (i, 0)),
        scratch_shapes=[pltpu.VMEM((tm, h), jnp.float32)],
        compiler_params=pltpu.CompilerParams(
            dimension_semantics=("parallel", "arbitrary"),
            vmem_limit_bytes=_vmem_limit(nbytes)),
        cost_estimate=pl.CostEstimate(flops=int(flops), transcendentals=0,
                                      bytes_accessed=int(bytes_accessed)),
    )(a_bf, xw_bf, bias_f32)


# -----------------------------------------------------------------------------
# Kernel 3: node-tiled global mean/max pool + MLP head
#   - mean pool: bf16 membership-mask matmul accumulated into [G,H] f32 scratch
#   - max pool : per-graph loop, one [tile,H] slab live at a time (no G copies)
#   - last tile: fc1 (split mean/max halves, no [G,2H] concat) + relu + fc2
# -----------------------------------------------------------------------------

def pool_mlp_kernel(batch_row_ref, batch_col_ref, h_ref,
                    wf1a_ref, wf1b_ref, bf1_ref, wf2_ref, bf2_ref,
                    o_ref, sum_ref, max_ref, cnt_ref):
    k = pl.program_id(0)
    g = sum_ref.shape[0]
    tn = h_ref.shape[0]

    @pl.when(k == 0)
    def _():
        sum_ref[...] = jnp.zeros_like(sum_ref)
        max_ref[...] = jnp.full_like(max_ref, -1e30)
        cnt_ref[...] = jnp.zeros_like(cnt_ref)

    h = h_ref[...]                                    # [tn, H] bf16
    batch_row = batch_row_ref[...]                    # [1, tn] int32

    # ---- mean-pool partial sums via MXU mask matmul ----
    graph_iota = jax.lax.broadcasted_iota(jnp.int32, (g, tn), 0)
    mask = jnp.broadcast_to(batch_row, (g, tn)) == graph_iota        # [G, tn]
    sum_ref[...] += jnp.dot(mask.astype(jnp.bfloat16), h,
                            preferred_element_type=jnp.float32)
    cnt_ref[...] += jnp.sum(mask.astype(jnp.float32), axis=1, keepdims=True)

    # ---- max-pool partial: loop over graphs, never materialize [G, tn, H] ----
    batch_col = batch_col_ref[...]                    # [tn, 1] int32
    neg_fill = jnp.full((), -1e30, dtype=h.dtype)

    @pl.loop(0, g)
    def _(gi):
        member = batch_col == gi                                     # [tn, 1]
        row_max = jnp.max(jnp.where(member, h, neg_fill),
                          axis=0, keepdims=True).astype(jnp.float32)  # [1, H]
        gsel = jax.lax.broadcasted_iota(jnp.int32, (g, 1), 0) == gi   # [G, 1]
        max_ref[...] = jnp.where(gsel,
                                 jnp.maximum(max_ref[...], row_max),
                                 max_ref[...])

    # ---- finalize: mean/max -> fc1 (+relu) -> fc2 ----
    @pl.when(k == pl.num_programs(0) - 1)
    def _():
        counts = cnt_ref[...]                                        # [G, 1]
        inv = pl.reciprocal(jnp.maximum(counts, 1.0), approx=True)    # EUP slot
        mean_p = sum_ref[...] * inv                                  # [G, H]
        mx_p = jnp.where(counts > 0.0, max_ref[...], 0.0)            # empty-graph guard

        hf = jnp.dot(mean_p.astype(jnp.bfloat16), wf1a_ref[...],
                     preferred_element_type=jnp.float32)
        hf = hf + jnp.dot(mx_p.astype(jnp.bfloat16), wf1b_ref[...],
                          preferred_element_type=jnp.float32)
        hf = jnp.maximum(hf + bf1_ref[...], 0.0)                     # [G, 1024]

        out = jnp.dot(hf.astype(jnp.bfloat16), wf2_ref[...],
                      preferred_element_type=jnp.float32) + bf2_ref[...]
        # TODO(synk): [G, 1] output lane width is 1 -> masked store; fine for
        # small G, pad/lay out lane-dense if G grows into the hundreds.
        o_ref[...] = out


def _pool_mlp(h2_bf, batch_row, batch_col, wf1a, wf1b, bf1, wf2, bf2,
              num_graphs, tn):
    n, h = h2_bf.shape
    fc_h = wf1a.shape[1]
    nbytes = (2 * (tn * h * 2 + tn * 4 * 2)
              + 2 * h * fc_h * 2 + fc_h * (4 + 2)
              + 3 * max(num_graphs, 8) * h * 4)
    return pl.pallas_call(
        pool_mlp_kernel,
        out_shape=jax.ShapeDtypeStruct((num_graphs, 1), jnp.float32),
        grid=(n // tn,),
        in_specs=[pl.BlockSpec((1, tn), lambda k: (0, k)),
                  pl.BlockSpec((tn, 1), lambda k: (k, 0)),
                  pl.BlockSpec((tn, h), lambda k: (k, 0)),
                  pl.BlockSpec((h, fc_h), lambda k: (0, 0)),
                  pl.BlockSpec((h, fc_h), lambda k: (0, 0)),
                  pl.BlockSpec((1, fc_h), lambda k: (0, 0)),
                  pl.BlockSpec((fc_h, 1), lambda k: (0, 0)),
                  pl.BlockSpec((1, 1), lambda k: (0, 0))],
        out_specs=pl.BlockSpec((num_graphs, 1), lambda k: (0, 0)),
        scratch_shapes=[pltpu.VMEM((num_graphs, h), jnp.float32),   # running sums
                        pltpu.VMEM((num_graphs, h), jnp.float32),   # running max
                        pltpu.VMEM((num_graphs, 1), jnp.float32)],  # counts
        compiler_params=pltpu.CompilerParams(
            dimension_semantics=("arbitrary",),
            vmem_limit_bytes=_vmem_limit(nbytes)),
    )(batch_row, batch_col, h2_bf, wf1a, wf1b, bf1, wf2, bf2)


# -----------------------------------------------------------------------------
# Forward wrapper
# -----------------------------------------------------------------------------

def gcn_forward(params, x, edge_index, edge_attr, batch, num_graphs):
    n = x.shape[0]
    h = params["w_conv1"].shape[1]
    bf16 = jnp.bfloat16

    a_bf = build_normalized_adjacency(edge_index, edge_attr, n).astype(bf16)

    # Tile sizes (v7x-safe budget: ~5.5 MiB resident at tm=512, tk=2048).
    tm = _pick_tile(n, 512, 8)        # A row tile (sublane dim)
    tk = _pick_tile(n, 2048, 256)     # A reduction tile (lane dim, 256-multiples)
    tn_pool = _pick_tile(n, 1024, 128)

    # conv1 / conv2: relu(A_norm @ (h @ W) + b), bf16 intermediates throughout.
    xw1 = _xw(x.astype(bf16), params["w_conv1"].astype(bf16))
    h1 = _a_matmul_bias_relu(a_bf, xw1, params["b_conv1"], tm, tk)
    xw2 = _xw(h1, params["w_conv2"].astype(bf16))
    h2 = _a_matmul_bias_relu(a_bf, xw2, params["b_conv2"], tm, tk)

    # pooling + MLP head
    batch_i32 = batch.astype(jnp.int32)
    wf1 = params["w_fc1"].astype(bf16)
    return _pool_mlp(h2,
                     batch_i32.reshape(1, n),
                     batch_i32.reshape(n, 1),
                     wf1[:h, :], wf1[h:, :],
                     params["b_fc1"],
                     params["w_fc2"].astype(bf16),
                     params["b_fc2"],
                     num_graphs, tn_pool)


# -----------------------------------------------------------------------------
# Glue: dense normalized adjacency (PyG GCNConv semantics)
# -----------------------------------------------------------------------------

def build_normalized_adjacency(edge_index, edge_attr, num_nodes):
    # TODO(synk): scatter-add adjacency construction has no clean Pallas TPU
    # equivalent; built in plain JAX (A_hat = A + I, D^-1/2 A_hat D^-1/2).
    src = edge_index[0]
    dst = edge_index[1]
    adj = jnp.zeros((num_nodes, num_nodes), jnp.float32)
    adj = adj.at[dst, src].add(edge_attr)          # row i aggregates from col j
    adj = adj + jnp.eye(num_nodes, dtype=jnp.float32)
    deg = jnp.sum(adj, axis=1)
    d_inv_sqrt = 1.0 / jnp.sqrt(jnp.maximum(deg, 1e-12))
    return d_inv_sqrt[:, None] * adj * d_inv_sqrt[None, :]


# -----------------------------------------------------------------------------
# Pure-JAX reference (for tolerance check) and parameter init
# -----------------------------------------------------------------------------

def gcn_reference(params, x, edge_index, edge_attr, batch, num_graphs):
    n = x.shape[0]
    a = build_normalized_adjacency(edge_index, edge_attr, n)
    h1 = jax.nn.relu(a @ (x @ params["w_conv1"]) + params["b_conv1"])
    h2 = jax.nn.relu(a @ (h1 @ params["w_conv2"]) + params["b_conv2"])
    seg = batch.astype(jnp.int32)
    sums = jax.ops.segment_sum(h2, seg, num_segments=num_graphs)
    counts = jax.ops.segment_sum(jnp.ones((n, 1), jnp.float32), seg,
                                 num_segments=num_graphs)
    mean_p = sums / jnp.maximum(counts, 1.0)
    max_p = jax.ops.segment_max(h2, seg, num_segments=num_graphs)
    max_p = jnp.where(counts > 0, max_p, 0.0)
    feat = jnp.concatenate([mean_p, max_p], axis=1)
    hf = jax.nn.relu(feat @ params["w_fc1"] + params["b_fc1"])
    return hf @ params["w_fc2"] + params["b_fc2"]


def init_params(key, input_dim, hidden_dim, fc_hidden=1024):
    def glorot(k, fan_in, fan_out):
        scale = jnp.sqrt(2.0 / (fan_in + fan_out))
        return scale * jax.random.normal(k, (fan_in, fan_out), jnp.float32)

    ks = jax.random.split(key, 6)
    return {
        "w_conv1": glorot(ks[0], input_dim, hidden_dim),
        "b_conv1": jnp.zeros((1, hidden_dim), jnp.float32),
        "w_conv2": glorot(ks[1], hidden_dim, hidden_dim),
        "b_conv2": jnp.zeros((1, hidden_dim), jnp.float32),
        "w_fc1": glorot(ks[2], hidden_dim * 2, fc_hidden),
        "b_fc1": 0.01 * jax.random.normal(ks[3], (1, fc_hidden), jnp.float32),
        "w_fc2": glorot(ks[4], fc_hidden, 1),
        "b_fc2": 0.01 * jax.random.normal(ks[5], (1, 1), jnp.float32),
    }


# -----------------------------------------------------------------------------
# Main
# -----------------------------------------------------------------------------

if __name__ == "__main__":
    key = jax.random.PRNGKey(0)
    k_x, k_e, k_p = jax.random.split(key, 3)

    INPUT_DIM = 8
    HIDDEN_DIM = 128          # matches the PyTorch spec (and lane width)
    NODES_PER_GRAPH = 8
    NUM_GRAPHS = 2
    N = NODES_PER_GRAPH * NUM_GRAPHS

    # Node features [N, F_in]
    x = jax.random.normal(k_x, (N, INPUT_DIM), jnp.float32)

    # Deterministic ring graph per component, bidirectional edges.
    srcs, dsts = [], []
    for g in range(NUM_GRAPHS):
        base = g * NODES_PER_GRAPH
        for i in range(NODES_PER_GRAPH):
            a = base + i
            b = base + (i + 1) % NODES_PER_GRAPH
            srcs += [a, b]
            dsts += [b, a]
    edge_index = jnp.array([srcs, dsts], dtype=jnp.int32)                 # [2, E]
    num_edges = edge_index.shape[1]
    edge_attr = 0.5 + jax.random.uniform(k_e, (num_edges,), jnp.float32)  # weights
    batch = jnp.repeat(jnp.arange(NUM_GRAPHS, dtype=jnp.int32), NODES_PER_GRAPH)

    params = init_params(k_p, INPUT_DIM, HIDDEN_DIM, fc_hidden=1024)

    out = gcn_forward(params, x, edge_index, edge_attr, batch, NUM_GRAPHS)
    out = jax.block_until_ready(out)
    assert out.shape == (NUM_GRAPHS, 1)
    assert jnp.all(jnp.isfinite(out))

    # bf16-level tolerance check against a pure-JAX f32 reference.
    ref = jax.block_until_ready(
        gcn_reference(params, x, edge_index, edge_attr, batch, NUM_GRAPHS))
    assert jnp.allclose(out, ref, rtol=1e-1, atol=1e-1), (out, ref)

    print("KERNEL_OK")
</pallas_src>

<mosaic_0001>
module attributes {stable_mosaic.version = 11 : i64} {
  func.func @xw_kernel(%arg0: i32, %arg1: memref<16x8xbf16, #tpu.memory_space<vmem>>, %arg2: memref<8x128xbf16, #tpu.memory_space<vmem>>, %arg3: memref<16x128xbf16, #tpu.memory_space<vmem>>) attributes {dimension_semantics = [#tpu.dimension_semantics<parallel>], iteration_bounds = array<i64: 1>, scalar_prefetch = 0 : i64, scratch_operands = 0 : i64, tpu.core_type = #tpu.core_type<tc>, window_params = [{transform_indices = @transform_0, window_bounds = array<i64: 16, 8>}, {pipeline_mode = #tpu.pipeline_mode<synchronous>, transform_indices = @transform_1, window_bounds = array<i64: 8, 128>}, {transform_indices = @transform_2, window_bounds = array<i64: 16, 128>}]} {
    %c0 = arith.constant 0 : index
    %c0_0 = arith.constant 0 : index
    %0 = vector.load %arg1[%c0, %c0_0] : memref<16x8xbf16, #tpu.memory_space<vmem>>, vector<16x8xbf16>
    %c0_1 = arith.constant 0 : index
    %c0_2 = arith.constant 0 : index
    %1 = vector.load %arg2[%c0_1, %c0_2] : memref<8x128xbf16, #tpu.memory_space<vmem>>, vector<8x128xbf16>
    %cst = arith.constant dense<0.000000e+00> : vector<16x128xf32>
    %2 = tpu.matmul %0, %1, %cst {dimension_numbers = #tpu.dot_dimension_numbers<[1], [0], [0], [1], [0, 0, 1, 1], [], []>} : vector<16x8xbf16>, vector<8x128xbf16>, vector<16x128xf32> -> vector<16x128xf32>
    %3 = arith.truncf %2 : vector<16x128xf32> to vector<16x128xbf16>
    %c0_3 = arith.constant 0 : index
    %c0_4 = arith.constant 0 : index
    %4 = vector.load %arg3[%c0_3, %c0_4] : memref<16x128xbf16, #tpu.memory_space<vmem>>, vector<16x128xbf16>
    tpu.vector_store %arg3[%c0_3, %c0_4], %3 {strides = array<i32>} : memref<16x128xbf16, #tpu.memory_space<vmem>>, vector<16x128xbf16>,
    return
  }
  func.func @transform_0(%arg0: i32) -> (i32, i32) {
    %c0_i32 = arith.constant 0 : i32
    %c0_i32_0 = arith.constant 0 : i32
    return %arg0, %c0_i32 : i32, i32
  }
  func.func @transform_1(%arg0: i32) -> (i32, i32) {
    %c0_i32 = arith.constant 0 : i32
    %c0_i32_0 = arith.constant 0 : i32
    %c0_i32_1 = arith.constant 0 : i32
    return %c0_i32, %c0_i32_0 : i32, i32
  }
  func.func @transform_2(%arg0: i32) -> (i32, i32) {
    %c0_i32 = arith.constant 0 : i32
    %c0_i32_0 = arith.constant 0 : i32
    return %arg0, %c0_i32 : i32, i32
  }
}

</mosaic_0001>

<llo_original>
// kernel: tpu_custom_call.1
$region0: #{tpu_custom_call.1}
  #allocation0 [shape = 'u32[]', space=smem, size = 0x4, offset = 0x4, fixed_abs, tag = 'smem constant byte address 0x4 - core index']
  #allocation1 [shape = 'u32[144,128]{1,0:T(1,128)}', space=vmem, size = 0x12000, scoped, tag = 'internal scratch']
  %s0 = inlined_call_operand.vmem [shape: bf16[16,8], index: 0, kind: input, shape index: {}]
  %s1 = inlined_call_operand.vmem [shape: bf16[8,128], index: 1, kind: input, shape index: {}]
  %s2 = inlined_call_operand.hbm [shape: bf16[16,128], index: 2, kind: output, shape index: {}]
  %s3 = sld [smem:[#allocation0]]
  $region18: #{tpu_custom_call.1} parent=0
    _
  %s5 = ssub.s32 1, %s3
  %s6 = scalar_select 0, %s5, %s3
  $region1: #{tpu_custom_call.1} parent=0
    #allocation2 [shape = 'u8[4096]{0}', space=vmem, size = 0x1000, scoped, tag = 'output window, operand 0, single buffered']
    #allocation3 [shape = 's32[1]{0}', space=sflag, size = 0x4, scoped, tag = 'scoped memory for tpu_custom_call.1']
    %7 = vsyncpa [#allocation3], 0
    // Predicated region
    $region2: #{tpu_custom_call.1} parent=1 // pred_check
      _
    $region3: #{tpu_custom_call.1} parent=1 // pred_check_branch
      %9 = sbr.rel (0) target = $region5
    $region4: #{tpu_custom_call.1} parent=1 // pred_region
      _
    $region5: #{tpu_custom_call.1} parent=1 // pred_fallthru
      _
    // Predicated region
    $region6: #{tpu_custom_call.1} parent=1 // pred_check
      _
    $region7: #{tpu_custom_call.1} parent=1 // pred_check_branch
      %11 = sbr.rel (0) target = $region9
    $region8: #{tpu_custom_call.1} parent=1 // pred_region
      _
    $region9: #{tpu_custom_call.1} parent=1 // pred_fallthru
      _
    %v13 = vld [vmem:[%s0] sm:$0xf]
    %v14 = vld [vmem:[%s0 + $0x4] sm:$0xf]
    %v15 = vld [vmem:[%s1] sm:$0xf]
    %v18 = vunpack.c.l.b16 %v13
    %v19 = vunpack.c.l.b16 %v14
    %v20 = vpack.c.b16 %v19, %v18
    %vm21 = vcmask 64512
    %v23 = vsel %vm21, %v20, 0
    %vm25 = vcmask 1043456
    %v27 = vsel %vm25, %v15, 0
    %29 = vmatprep.subr.bf16.mxu0 0
    %30 = vmatpush1.bf16.msra.mxu0 %v27
    %31 = vmatprep.subr.bf16.mxu0 0
    %32 = vmatpush1.bf16.msra.mxu0 0
    %33 = vmatprep.subr.bf16.mxu0 0
    %34 = vmatpush1.bf16.msra.mxu0 0
    %35 = vmatprep.subr.bf16.mxu0 0
    %36 = vmatpush1.bf16.msra.mxu0 0
    %37 = vmatprep.subr.bf16.mxu0 0
    %38 = vmatpush1.bf16.msra.mxu0 0
    %39 = vmatprep.subr.bf16.mxu0 0
    %40 = vmatpush1.bf16.msra.mxu0 0
    %41 = vmatprep.subr.bf16.mxu0 0
    %42 = vmatpush1.bf16.msra.mxu0 0
    %43 = vmatprep.subr.bf16.mxu0 0
    %44 = vmatpush1.bf16.msra.mxu0 0
    %45 = vmatprep.subr.bf16.mxu0 0
    %46 = vmatpush1.bf16.msra.mxu0 0
    %47 = vmatprep.subr.bf16.mxu0 0
    %48 = vmatpush1.bf16.msra.mxu0 0
    %49 = vmatprep.subr.bf16.mxu0 0
    %50 = vmatpush1.bf16.msra.mxu0 0
    %51 = vmatprep.subr.bf16.mxu0 0
    %52 = vmatpush1.bf16.msra.mxu0 0
    %53 = vmatprep.subr.bf16.mxu0 0
    %54 = vmatpush1.bf16.msra.mxu0 0
    %55 = vmatprep.subr.bf16.mxu0 0
    %56 = vmatpush1.bf16.msra.mxu0 0
    %57 = vmatprep.subr.bf16.mxu0 0
    %58 = vmatpush1.bf16.msra.mxu0 0
    %59 = vmatprep.subr.bf16.mxu0 0
    %60 = vmatpush1.bf16.msra.mxu0 0
    %61 = vmatprep.mubr.bf16.mxu0 0
    %62 = vmatmul.mubr.bf16.gmra.mrb[0].mxu0 %v23
    %v63 = vpop.f32.mrb[0].mxu0
    %v64 = vadd.f32 0.0, %v63
    %v65 = vpop.f32.mrb[0].mxu0
    %v66 = vpop.f32.mrb[0].mxu0
    %v67 = vadd.f32 0.0, %v66
    %v68 = vpop.f32.mrb[0].mxu0
    %69 = vdwg.mxu0
    %v70 = vpack.c.bf16 %v67, %v64
    %v72 = vunpack.c.l.b16 %v70
    %v73 = vunpack.c.h.b16 %v70
    %v74 = vpack.c.b16 %v72, %v72
    %v75 = vpack.c.b16 %v73, %v73
    %78 = vst [vmem:[#allocation2] sm:$0xf] %v74
    %79 = vst [vmem:[#allocation2 + $0x4] sm:$0xf] %v75
    // Predicated region
    $region10: #{tpu_custom_call.1} parent=1 // pred_check
      _
    $region11: #{tpu_custom_call.1} parent=1 // pred_check_branch
      %81 = sbr.rel (0) target = $region13
    $region12: #{tpu_custom_call.1} parent=1 // pred_region
      %s83 = ssub.s32 128, 128
      %84 = vsyncadd [#allocation3], %s83
      %s85 = sshll.u32 [#allocation2], 4
      %s86 = int_to_ptr.vmem [resolvable:$true] %s85
      %91 = dma.vmem_to_hbm [thread:$0]  %s86, 128, %s2, [#allocation3], 64, 64, 4
    $region13: #{tpu_custom_call.1} parent=1 // pred_fallthru
      _
    // Predicated region
    $region14: #{tpu_custom_call.1} parent=1 // pred_check
      _
    $region15: #{tpu_custom_call.1} parent=1 // pred_check_branch
      %93 = sbr.rel (0) target = $region17
    $region16: #{tpu_custom_call.1} parent=1 // pred_region
      %94 = dma.done [#allocation3], 128
    $region17: #{tpu_custom_call.1} parent=1 // pred_fallthru
      _
    %95 = vsyncpa [#allocation3], 1

</llo_original>
